<compile_context>
chip_gen: v6e
topology: v6e:2x2x1
jax: 0.10.0
libtpu: 0.0.40
codegen_flags: <defaults>
</compile_context>

<pallas_src>
import functools

import jax
import jax.numpy as jnp
from jax.experimental import pallas as pl
from jax.experimental.pallas import tpu as pltpu


def _round_up(x: int, m: int) -> int:
    return ((x + m - 1) // m) * m


# -----------------------------------------------------------------------------
# Kernels
# -----------------------------------------------------------------------------
def _scalar_head_kernel(x_ref, w1_ref, b1_ref, w2_ref, b2_ref, o_ref, *,
                        lane_dense: bool):
    """Value head for num_labels == 1.

    x_ref : (tm, D)   f32/bf16  activation rows (auto-pipelined)
    w1_ref: (D, D)    bf16      dense weight, (in, out) layout, VMEM resident
    b1_ref: (1, D)    f32       dense bias
    w2_ref: (1, D)    f32       out_proj weight row
    b2_ref: (1, 1)    f32       out_proj bias
    o_ref : (1,1,tm)  f32       lane-dense output   (or (tm, 1) if lane_dense=False)
    """
    # TODO(synk): dropout is identity in eval mode; training-mode dropout
    # (pltpu.prng_* + mask/scale) is not implemented here.
    x = x_ref[...].astype(jnp.bfloat16)                  # no-op if x already bf16
    h = jnp.dot(x, w1_ref[...], preferred_element_type=jnp.float32)
    h = jnp.tanh(h + b1_ref[...])                        # f32 tanh on the EUP
    # num_labels == 1: VPU multiply + XLU lane reduction replaces the
    # degenerate (tm, D) @ (D, 1) MXU pass.
    y = jnp.sum(h * w2_ref[...], axis=-1, keepdims=True) + b2_ref[...]  # (tm, 1)
    if lane_dense:
        # Rows on the lane axis -> unmasked, lane-dense stores (tm % 128 == 0).
        o_ref[...] = y.T.reshape(1, 1, -1).astype(o_ref.dtype)
    else:
        o_ref[...] = y.astype(o_ref.dtype)


def _general_head_kernel(x_ref, w1_ref, b1_ref, w2_ref, b2_ref, o_ref):
    """num_labels > 1: both matmuls run bf16 x bf16 on the MXU, f32 accum."""
    x = x_ref[...].astype(jnp.bfloat16)
    h = jnp.tanh(jnp.dot(x, w1_ref[...], preferred_element_type=jnp.float32)
                 + b1_ref[...])
    y = jnp.dot(h.astype(jnp.bfloat16), w2_ref[...],
                preferred_element_type=jnp.float32) + b2_ref[...]
    o_ref[...] = y.astype(o_ref.dtype)


# -----------------------------------------------------------------------------
# Weight preparation (do once at model-load time, NOT per forward call)
# -----------------------------------------------------------------------------
def prepare_value_head_params(dense_w, dense_b, out_w, out_b):
    """Transpose torch (out, in) Linear weights to (in, out); big dense weight
    to bf16 for the MXU; out_proj weight to bf16 only on the MXU (L>1) path."""
    dense_w = jnp.asarray(dense_w, jnp.float32)
    out_w = jnp.asarray(out_w, jnp.float32)
    D = dense_w.shape[0]
    L = out_w.shape[0]
    w1 = dense_w.T.astype(jnp.bfloat16)                    # (D, D) bf16
    b1 = jnp.asarray(dense_b, jnp.float32).reshape(1, D)   # (1, D) f32
    if L == 1:
        w2 = out_w.reshape(1, D)                           # f32 row, VPU/XLU path
    else:
        w2 = out_w.T.astype(jnp.bfloat16)                  # (D, L) bf16, MXU path
    b2 = jnp.asarray(out_b, jnp.float32).reshape(1, L)     # (1, L) f32
    return w1, b1, w2, b2


# -----------------------------------------------------------------------------
# Forward
# -----------------------------------------------------------------------------
def _choose_tm(M: int) -> int:
    """Row tile: single block for small M; for large (compute-bound) M pick
    <=1024-row tiles with an even number of blocks so both v7x TensorCores
    get work via the 'parallel' grid axis."""
    if M <= 1024:
        return M
    nblk = 2 * pl.cdiv(M, 2048)
    return min(1024, _round_up(pl.cdiv(M, nblk), 128))


def bart_value_head(hidden_states, params, *, tm=None, lane_dense_out=True):
    """BARTValueHead forward (eval mode).
    hidden_states: (B, S, D) float32 or bfloat16.
    Returns (B, S, num_labels) float32."""
    w1, b1, w2, b2 = params
    B, S, D = hidden_states.shape
    L = b2.shape[-1]
    M = B * S

    if tm is None:
        tm = _choose_tm(M)
    tm = min(int(tm), M)
    if tm < M:
        align = 128 if (M >= 128 and tm >= 128) else 8
        tm = _round_up(tm, align)
        if tm >= M:                    # rounding swallowed the whole array
            tm = M
    nblk = pl.cdiv(M, tm)              # last block may be ragged; no jnp.pad

    x2d = hidden_states.reshape(M, D)  # native dtype; no f32 forcing
    x_bytes = x2d.dtype.itemsize

    # Whole-operand VMEM residency for the constant operands: one copy for the
    # entire grid (no per-step double buffering).
    wspec = pl.BlockSpec(memory_space=pltpu.MemorySpace.VMEM)
    x_spec = pl.BlockSpec((tm, D), lambda i: (i, 0))

    cost = pl.CostEstimate(
        flops=2 * M * D * D + 2 * M * D * L,
        transcendentals=M * D,  # tanh
        bytes_accessed=(x_bytes * M * D + 2 * D * D + 4 * D
                        + w2.dtype.itemsize * w2.size + 4 * L + 4 * M * L),
    )
    ckw = dict(dimension_semantics=("parallel",))
    if tm > 1024:
        # Only needed if a caller forces very large tiles (mind v7x 64 MiB /
        # v5e 16 MiB scoped default).
        need = (2 * D * D + 2 * tm * D * x_bytes + tm * D * 4
                + 4 * tm * max(L, 128) + (1 << 20))
        ckw["vmem_limit_bytes"] = int(1.5 * need)
    cparams = pltpu.CompilerParams(**ckw)

    if L == 1:
        kernel = functools.partial(_scalar_head_kernel,
                                   lane_dense=lane_dense_out)
        if lane_dense_out:
            out_shape = jax.ShapeDtypeStruct((nblk, 1, tm), jnp.float32)
            out_spec = pl.BlockSpec((1, 1, tm), lambda i: (i, 0, 0))
        else:
            out_shape = jax.ShapeDtypeStruct((M, 1), jnp.float32)
            out_spec = pl.BlockSpec((tm, 1), lambda i: (i, 0))
        out = pl.pallas_call(
            kernel,
            out_shape=out_shape,
            grid_spec=pltpu.PrefetchScalarGridSpec(
                num_scalar_prefetch=0,
                grid=(nblk,),
                in_specs=[x_spec, wspec, wspec, wspec, wspec],
                out_specs=out_spec,
            ),
            compiler_params=cparams,
            cost_estimate=cost,
        )(x2d, w1, b1, w2, b2)
        if lane_dense_out:
            return out.reshape(nblk * tm)[:M].reshape(B, S, 1)
        return out.reshape(B, S, 1)

    # num_labels > 1: ragged last output block's OOB writes are discarded.
    out = pl.pallas_call(
        _general_head_kernel,
        out_shape=jax.ShapeDtypeStruct((M, L), jnp.float32),
        grid_spec=pltpu.PrefetchScalarGridSpec(
            num_scalar_prefetch=0,
            grid=(nblk,),
            in_specs=[x_spec, wspec, wspec, wspec, wspec],
            out_specs=pl.BlockSpec((tm, L), lambda i: (i, 0)),
        ),
        compiler_params=cparams,
        cost_estimate=cost,
    )(x2d, w1, b1, w2, b2)
    return out.reshape(B, S, L)


# -----------------------------------------------------------------------------
# Demo / correctness check
# -----------------------------------------------------------------------------
if __name__ == "__main__":
    # config: d_model=32, num_labels=1 (classifier_dropout unused at inference)
    B, S, D, L = 2, 8, 32, 1

    key = jax.random.PRNGKey(0)
    k_x, k_w1, k_b1, k_w2, k_b2, k_x2, k_w3, k_b3 = jax.random.split(key, 8)

    hidden_states = jax.random.normal(k_x, (B, S, D), dtype=jnp.float32)
    dense_w = jax.random.normal(k_w1, (D, D), dtype=jnp.float32) * 0.02
    dense_b = jax.random.normal(k_b1, (D,), dtype=jnp.float32) * 0.02
    out_w = jax.random.normal(k_w2, (L, D), dtype=jnp.float32) * 0.02
    out_b = jax.random.normal(k_b2, (L,), dtype=jnp.float32) * 0.02

    params = prepare_value_head_params(dense_w, dense_b, out_w, out_b)
    w1_bf16 = params[0]

    def ref_matched(hs, w2p, b2p):
        """Same precision path as the kernel (bf16 first matmul)."""
        x2 = hs.reshape(-1, D).astype(jnp.bfloat16)
        h = jnp.tanh(jnp.dot(x2, w1_bf16, preferred_element_type=jnp.float32)
                     + dense_b)
        if w2p.ndim == 2 and w2p.shape[0] == 1:          # scalar-head layout
            y = jnp.sum(h * w2p, axis=-1, keepdims=True) + b2p
        else:                                            # (D, L) bf16 layout
            y = jnp.dot(h.astype(jnp.bfloat16), w2p,
                        preferred_element_type=jnp.float32) + b2p
        return y.reshape(hs.shape[0], hs.shape[1], -1)

    def ref_f32(hs, ow, ob):
        return jnp.tanh(hs @ dense_w.T + dense_b) @ ow.T + ob

    # 1) Main scalar-head path: f32 activations, lane-dense output.
    out = jax.block_until_ready(bart_value_head(hidden_states, params))
    assert out.shape == (B, S, L)
    assert jnp.allclose(out, ref_matched(hidden_states, params[2], params[3]),
                        atol=5e-4, rtol=5e-4)
    assert jnp.allclose(out, ref_f32(hidden_states, out_w, out_b),
                        atol=2e-2, rtol=2e-2)

    # 2) bf16 activation streaming (halves the x HBM stream; same math).
    out_bf = jax.block_until_ready(
        bart_value_head(hidden_states.astype(jnp.bfloat16), params))
    assert jnp.allclose(out_bf, ref_matched(hidden_states, params[2], params[3]),
                        atol=5e-4, rtol=5e-4)

    # 3) Ragged last block (no jnp.pad): M=200 rows streamed with tm=128.
    B2, S2 = 2, 100
    hs2 = jax.random.normal(k_x2, (B2, S2, D), dtype=jnp.float32)
    out2 = jax.block_until_ready(bart_value_head(hs2, params, tm=128))
    assert out2.shape == (B2, S2, L)
    assert jnp.allclose(out2, ref_matched(hs2, params[2], params[3]),
                        atol=5e-4, rtol=5e-4)

    # 4) num_labels > 1 path (bf16 second matmul on the MXU).
    L2 = 4
    out_w2 = jax.random.normal(k_w3, (L2, D), dtype=jnp.float32) * 0.02
    out_b2 = jax.random.normal(k_b3, (L2,), dtype=jnp.float32) * 0.02
    params2 = prepare_value_head_params(dense_w, dense_b, out_w2, out_b2)
    out3 = jax.block_until_ready(bart_value_head(hidden_states, params2))
    assert out3.shape == (B, S, L2)
    assert jnp.allclose(out3, ref_matched(hidden_states, params2[2], params2[3]),
                        atol=5e-4, rtol=5e-4)
    assert jnp.allclose(out3, ref_f32(hidden_states, out_w2, out_b2),
                        atol=2e-2, rtol=2e-2)

    print("KERNEL_OK")
</pallas_src>

<mosaic_0001>
module attributes {stable_mosaic.version = 11 : i64} {
  func.func @_scalar_head_kernel(%arg0: i32, %arg1: memref<16x32xf32, #tpu.memory_space<vmem>>, %arg2: memref<32x32xbf16, #tpu.memory_space<vmem>>, %arg3: memref<1x32xf32, #tpu.memory_space<vmem>>, %arg4: memref<1x32xf32, #tpu.memory_space<vmem>>, %arg5: memref<1x1xf32, #tpu.memory_space<vmem>>, %arg6: memref<1x1x16xf32, #tpu.memory_space<vmem>>) attributes {dimension_semantics = [#tpu.dimension_semantics<parallel>], iteration_bounds = array<i64: 1>, scalar_prefetch = 0 : i64, scratch_operands = 0 : i64, tpu.core_type = #tpu.core_type<tc>, window_params = [{transform_indices = @transform_0, window_bounds = array<i64: 16, 32>}, {pipeline_mode = #tpu.pipeline_mode<synchronous>, transform_indices = @transform_1, window_bounds = array<i64: 32, 32>}, {pipeline_mode = #tpu.pipeline_mode<synchronous>, transform_indices = @transform_2, window_bounds = array<i64: 1, 32>}, {pipeline_mode = #tpu.pipeline_mode<synchronous>, transform_indices = @transform_3, window_bounds = array<i64: 1, 32>}, {pipeline_mode = #tpu.pipeline_mode<synchronous>, transform_indices = @transform_4, window_bounds = array<i64: 1, 1>}, {transform_indices = @transform_5, window_bounds = array<i64: 1, 1, 16>}]} {
    %c0 = arith.constant 0 : index
    %c0_0 = arith.constant 0 : index
    %0 = vector.load %arg1[%c0, %c0_0] : memref<16x32xf32, #tpu.memory_space<vmem>>, vector<16x32xf32>
    %1 = arith.truncf %0 : vector<16x32xf32> to vector<16x32xbf16>
    %c0_1 = arith.constant 0 : index
    %c0_2 = arith.constant 0 : index
    %2 = vector.load %arg2[%c0_1, %c0_2] : memref<32x32xbf16, #tpu.memory_space<vmem>>, vector<32x32xbf16>
    %cst = arith.constant dense<0.000000e+00> : vector<16x32xf32>
    %3 = tpu.matmul %1, %2, %cst {dimension_numbers = #tpu.dot_dimension_numbers<[1], [0], [0], [1], [0, 0, 1, 1], [], []>} : vector<16x32xbf16>, vector<32x32xbf16>, vector<16x32xf32> -> vector<16x32xf32>
    %c0_3 = arith.constant 0 : index
    %c0_4 = arith.constant 0 : index
    %4 = vector.load %arg3[%c0_3, %c0_4] : memref<1x32xf32, #tpu.memory_space<vmem>>, vector<1x32xf32>
    %5 = vector.broadcast %4 : vector<1x32xf32> to vector<16x32xf32>
    %6 = arith.addf %3, %5 : vector<16x32xf32>
    %7 = math.tanh %6 : vector<16x32xf32>
    %c0_5 = arith.constant 0 : index
    %c0_6 = arith.constant 0 : index
    %8 = vector.load %arg4[%c0_5, %c0_6] : memref<1x32xf32, #tpu.memory_space<vmem>>, vector<1x32xf32>
    %9 = vector.broadcast %8 : vector<1x32xf32> to vector<16x32xf32>
    %10 = arith.mulf %7, %9 : vector<16x32xf32>
    %cst_7 = arith.constant dense<0.000000e+00> : vector<16xf32>
    %11 = vector.multi_reduction <add>, %10, %cst_7 [1] : vector<16x32xf32> to vector<16xf32>
    %12 = vector.shape_cast %11 : vector<16xf32> to vector<16x1xf32>
    %c0_8 = arith.constant 0 : index
    %c0_9 = arith.constant 0 : index
    %13 = vector.load %arg5[%c0_8, %c0_9] : memref<1x1xf32, #tpu.memory_space<vmem>>, vector<1x1xf32>
    %14 = vector.broadcast %13 : vector<1x1xf32> to vector<16x1xf32>
    %15 = arith.addf %12, %14 : vector<16x1xf32>
    %16 = tpu.transpose %15, [1, 0] : vector<16x1xf32> -> vector<1x16xf32>
    %17 = vector.shape_cast %16 : vector<1x16xf32> to vector<1x1x16xf32>
    %c0_10 = arith.constant 0 : index
    %c0_11 = arith.constant 0 : index
    %c0_12 = arith.constant 0 : index
    %18 = vector.load %arg6[%c0_10, %c0_11, %c0_12] : memref<1x1x16xf32, #tpu.memory_space<vmem>>, vector<1x1x16xf32>
    tpu.vector_store %arg6[%c0_10, %c0_11, %c0_12], %17 {strides = array<i32>} : memref<1x1x16xf32, #tpu.memory_space<vmem>>, vector<1x1x16xf32>,
    return
  }
  func.func @transform_0(%arg0: i32) -> (i32, i32) {
    %c0_i32 = arith.constant 0 : i32
    %c0_i32_0 = arith.constant 0 : i32
    return %arg0, %c0_i32 : i32, i32
  }
  func.func @transform_1(%arg0: i32) -> (i32, i32) {
    %c0_i32 = arith.constant 0 : i32
    %c0_i32_0 = arith.constant 0 : i32
    %c0_i32_1 = arith.constant 0 : i32
    return %c0_i32, %c0_i32_0 : i32, i32
  }
  func.func @transform_2(%arg0: i32) -> (i32, i32) {
    %c0_i32 = arith.constant 0 : i32
    %c0_i32_0 = arith.constant 0 : i32
    %c0_i32_1 = arith.constant 0 : i32
    return %c0_i32, %c0_i32_0 : i32, i32
  }
  func.func @transform_3(%arg0: i32) -> (i32, i32) {
    %c0_i32 = arith.constant 0 : i32
    %c0_i32_0 = arith.constant 0 : i32
    %c0_i32_1 = arith.constant 0 : i32
    return %c0_i32, %c0_i32_0 : i32, i32
  }
  func.func @transform_4(%arg0: i32) -> (i32, i32) {
    %c0_i32 = arith.constant 0 : i32
    %c0_i32_0 = arith.constant 0 : i32
    %c0_i32_1 = arith.constant 0 : i32
    return %c0_i32, %c0_i32_0 : i32, i32
  }
  func.func @transform_5(%arg0: i32) -> (i32, i32, i32) {
    %c0_i32 = arith.constant 0 : i32
    %c0_i32_0 = arith.constant 0 : i32
    %c0_i32_1 = arith.constant 0 : i32
    return %arg0, %c0_i32, %c0_i32_0 : i32, i32, i32
  }
}

</mosaic_0001>

<llo_original>
// kernel: tpu_custom_call.1
$region0: #{tpu_custom_call.1}
  #allocation0 [shape = 'u32[]', space=smem, size = 0x4, offset = 0x4, fixed_abs, tag = 'smem constant byte address 0x4 - core index']
  #allocation1 [shape = 'u32[144,128]{1,0:T(1,128)}', space=vmem, size = 0x12000, scoped, tag = 'internal scratch']
  #allocation2 [shape = 'f32[1,1]{1,0:T(1,128)S(1)}', space=vmem, size = 0x200, scoped, tag = 'scoped memory for tpu_custom_call.1']
  %s0 = inlined_call_operand.hbm [shape: f32[16,32], index: 0, kind: input, shape index: {}]
  %s1 = inlined_call_operand.hbm [shape: bf16[32,32], index: 1, kind: input, shape index: {}]
  %s2 = inlined_call_operand.vmem [shape: f32[1,32], index: 2, kind: input, shape index: {}]
  %s3 = inlined_call_operand.vmem [shape: f32[1,32], index: 3, kind: input, shape index: {}]
  %s4 = inlined_call_operand.<no memory space> [shape: f32[1,1], index: 4, kind: input, shape index: {}]
  %s5 = inlined_call_operand.hbm [shape: f32[1,1,16], index: 5, kind: output, shape index: {}]
  %s6 = sld [smem:[#allocation0]]
  $region38: #{tpu_custom_call.1} parent=0
    _
  %s8 = ssub.s32 1, %s6
  %s9 = scalar_select 0, %s8, %s6
  %v10 = vstv %s4
  %11 = vst [vmem:[#allocation2] sm:$0x1] %v10
  $region1: #{tpu_custom_call.1} parent=0
    #allocation3 [shape = 'u8[8192]{0}', space=vmem, size = 0x2000, scoped, tag = 'input window, operand 0, single buffered']
    #allocation4 [shape = 's32[1]{0}', space=sflag, size = 0x4, scoped, tag = 'scoped memory for tpu_custom_call.1']
    #allocation5 [shape = 's32[1]{0}', space=sflag, size = 0x4, scoped, tag = 'scoped memory for tpu_custom_call.1']
    #allocation6 [shape = 'u8[8192]{0}', space=vmem, size = 0x2000, scoped, tag = 'input window, operand 1, single buffered']
    #allocation7 [shape = 's32[1]{0}', space=sflag, size = 0x4, scoped, tag = 'scoped memory for tpu_custom_call.1']
    #allocation8 [shape = 'u8[512]{0}', space=vmem, size = 0x400, scoped, tag = 'output window, operand 0, single buffered']
    %12 = vsyncpa [#allocation4], 0
    %13 = vsyncpa [#allocation7], 0
    %14 = vsyncpa [#allocation5], 0
    // Predicated region
    $region2: #{tpu_custom_call.1} parent=1 // pred_check
      _
    $region3: #{tpu_custom_call.1} parent=1 // pred_check_branch
      %16 = sbr.rel (0) target = $region5
    $region4: #{tpu_custom_call.1} parent=1 // pred_region
      %s18 = ssub.s32 256, 256
      %19 = vsyncadd [#allocation4], %s18
      %s20 = sshll.u32 [#allocation3], 4
      %s21 = int_to_ptr.vmem [resolvable:$true] %s20
      %26 = dma.hbm_to_vmem [thread:$0]  %s0, 256, %s21, [#allocation4], 128, 128, 8
    $region5: #{tpu_custom_call.1} parent=1 // pred_fallthru
      _
    // Predicated region
    $region6: #{tpu_custom_call.1} parent=1 // pred_check
      _
    $region7: #{tpu_custom_call.1} parent=1 // pred_check_branch
      %28 = sbr.rel (0) target = $region9
    $region8: #{tpu_custom_call.1} parent=1 // pred_region
      %s30 = ssub.s32 256, 256
      %31 = vsyncadd [#allocation7], %s30
      %s32 = sshll.u32 [#allocation6], 4
      %s33 = int_to_ptr.vmem [resolvable:$true] %s32
      %38 = dma.hbm_to_vmem [thread:$0]  %s1, 256, %s33, [#allocation7], 64, 64, 4
    $region9: #{tpu_custom_call.1} parent=1 // pred_fallthru
      _
    // Predicated region
    $region10: #{tpu_custom_call.1} parent=1 // pred_check
      _
    $region11: #{tpu_custom_call.1} parent=1 // pred_check_branch
      %40 = sbr.rel (0) target = $region13
    $region12: #{tpu_custom_call.1} parent=1 // pred_region
      _
    $region13: #{tpu_custom_call.1} parent=1 // pred_fallthru
      _
    // Predicated region
    $region14: #{tpu_custom_call.1} parent=1 // pred_check
      _
    $region15: #{tpu_custom_call.1} parent=1 // pred_check_branch
      %42 = sbr.rel (0) target = $region17
    $region16: #{tpu_custom_call.1} parent=1 // pred_region
      _
    $region17: #{tpu_custom_call.1} parent=1 // pred_fallthru
      _
    // Predicated region
    $region18: #{tpu_custom_call.1} parent=1 // pred_check
      _
    $region19: #{tpu_custom_call.1} parent=1 // pred_check_branch
      %44 = sbr.rel (0) target = $region21
    $region20: #{tpu_custom_call.1} parent=1 // pred_region
      _
    $region21: #{tpu_custom_call.1} parent=1 // pred_fallthru
      _
    // Predicated region
    $region22: #{tpu_custom_call.1} parent=1 // pred_check
      _
    $region23: #{tpu_custom_call.1} parent=1 // pred_check_branch
      %46 = sbr.rel (0) target = $region25
    $region24: #{tpu_custom_call.1} parent=1 // pred_region
      %47 = dma.done [#allocation4], 256
    $region25: #{tpu_custom_call.1} parent=1 // pred_fallthru
      _
    // Predicated region
    $region26: #{tpu_custom_call.1} parent=1 // pred_check
      _
    $region27: #{tpu_custom_call.1} parent=1 // pred_check_branch
      %49 = sbr.rel (0) target = $region29
    $region28: #{tpu_custom_call.1} parent=1 // pred_region
      %50 = dma.done [#allocation7], 256
    $region29: #{tpu_custom_call.1} parent=1 // pred_fallthru
      _
    %v52 = vld [vmem:[#allocation3] sm:$0xff]
    %v53 = vld [vmem:[#allocation3 + $0x8] sm:$0xff]
    %v54 = vpack.c.bf16 %v53, %v52
    %v55 = vld [vmem:[#allocation6] sm:$0xf]
    %v56 = vld [vmem:[#allocation6 + $0x4] sm:$0xf]
    %v57 = vld [vmem:[#allocation6 + $0x8] sm:$0xf]
    %v58 = vld [vmem:[#allocation6 + $0xc] sm:$0xf]
    %v59 = vld [vmem:[%s2] sm:$0x1]
    %v61 = vlaneseq
    %v62 = vshrl.u32 %v61, 7
    %v63 = vsub.s32 0, %v62
    %v64 = vrot.slane %v59, %v63
    %v70 = vunpack.c.l.b16 %v55
    %v71 = vunpack.c.l.b16 %v56
    %v72 = vunpack.c.l.b16 %v57
    %v73 = vunpack.c.l.b16 %v58
    %v74 = vpack.c.b16 %v71, %v70
    %v75 = vpack.c.b16 %v73, %v72
    %vm78 = vcmask 261120
    %v80 = vsel %vm78, %v54, 0
    %82 = vmatprep.subr.bf16.mxu0 0
    %83 = vmatpush1.bf16.msra.mxu0 0
    %84 = vmatprep.subr.bf16.mxu0 0
    %85 = vmatpush1.bf16.msra.mxu0 0
    %86 = vmatprep.subr.bf16.mxu0 0
    %87 = vmatpush1.bf16.msra.mxu0 0
    %88 = vmatprep.subr.bf16.mxu0 0
    %89 = vmatpush1.bf16.msra.mxu0 0
    %90 = vmatprep.subr.bf16.mxu0 0
    %91 = vmatpush1.bf16.msra.mxu0 0
    %92 = vmatprep.subr.bf16.mxu0 0
    %93 = vmatpush1.bf16.msra.mxu0 0
    %94 = vmatprep.subr.bf16.mxu0 0
    %95 = vmatpush1.bf16.msra.mxu0 %v75
    %96 = vmatprep.subr.bf16.mxu0 0
    %97 = vmatpush1.bf16.msra.mxu0 %v74
    %98 = vmatprep.subr.bf16.mxu0 0
    %99 = vmatpush2.bf16.msra.mxu0 0
    %100 = vmatprep.subr.bf16.mxu0 0
    %101 = vmatpush2.bf16.msra.mxu0 0
    %102 = vmatprep.subr.bf16.mxu0 0
    %103 = vmatpush2.bf16.msra.mxu0 0
    %104 = vmatprep.subr.bf16.mxu0 0
    %105 = vmatpush2.bf16.msra.mxu0 0
    %106 = vmatprep.subr.bf16.mxu0 0
    %107 = vmatpush2.bf16.msra.mxu0 0
    %108 = vmatprep.subr.bf16.mxu0 0
    %109 = vmatpush2.bf16.msra.mxu0 0
    %110 = vmatprep.subr.bf16.mxu0 0
    %111 = vmatpush2.bf16.msra.mxu0 0
    %112 = vmatprep.subr.bf16.mxu0 0
    %113 = vmatpush2.bf16.msra.mxu0 0
    %114 = vmatprep.mubr.bf16.mxu0 0
    %115 = vmatmul.mubr.bf16.gmra.mxu0 %v80
    %v116 = vpop.f32.mrf.mxu0
    %v117 = vadd.f32 %v64, %v116
    %v118 = vpop.f32.mrf.mxu0
    %v119 = vpop.f32.mrf.mxu0
    %v120 = vadd.f32 %v64, %v119
    %v121 = vpop.f32.mrf.mxu0
    %122 = vdwg.mxu0
    %v123 = vtanh.pop %v117
    %v124 = vtanh.pop %v120
    %v125 = vld [vmem:[%s3] sm:$0x1]
    %v127 = vlaneseq
    %v128 = vshrl.u32 %v127, 7
    %v129 = vsub.s32 0, %v128
    %v130 = vrot.slane %v125, %v129
    %v132 = vmul.f32 %v123, %v130
    %v133 = vmul.f32 %v124, %v130
    %v134 = vsel %vm78, %v132, 0.0
    %135 = vadd.xlane.f32.xlu0 %v134
    %v136 = vpop.xlane.xlu0 %135
    %v137 = vsel %vm78, %v133, 0.0
    %138 = vadd.xlane.f32.xlu0 %v137
    %v139 = vpop.xlane.xlu0 %138
    %v140 = vld [vmem:[#allocation2] sm:$0x1]
    %v142 = vlaneseq
    %v143 = vshrl.u32 %v142, 7
    %v144 = vsub.s32 0, %v143
    %v145 = vrot.slane %v140, %v144
    %v147 = vadd.f32 %v136, %v145
    %v148 = vadd.f32 %v139, %v145
    %149 = vxpose.xlu0.b32.start [1/16] %v147, 128
    %150 = vxpose.xlu0.b32.cont [2/16] %v148, 128
    %151 = vxpose.xlu0.b32.cont [3/16] 0.0, 128
    %152 = vxpose.xlu0.b32.cont [4/16] 0.0, 128
    %153 = vxpose.xlu0.b32.cont [5/16] 0.0, 128
    %154 = vxpose.xlu0.b32.cont [6/16] 0.0, 128
    %155 = vxpose.xlu0.b32.cont [7/16] 0.0, 128
    %156 = vxpose.xlu0.b32.cont [8/16] 0.0, 128
    %157 = vxpose.xlu0.b32.cont [9/16] 0.0, 128
    %158 = vxpose.xlu0.b32.cont [10/16] 0.0, 128
    %159 = vxpose.xlu0.b32.cont [11/16] 0.0, 128
    %160 = vxpose.xlu0.b32.cont [12/16] 0.0, 128
    %161 = vxpose.xlu0.b32.cont [13/16] 0.0, 128
    %162 = vxpose.xlu0.b32.cont [14/16] 0.0, 128
    %163 = vxpose.xlu0.b32.cont [15/16] 0.0, 128
    %164 = vxpose.xlu0.b32.end [16/16] 0.0, 128
    %v165 = vpop.trf.xlu0
    %v166 = vpop.trf.xlu0
    %v167 = vpop.trf.xlu0
    %v168 = vpop.trf.xlu0
    %v169 = vpop.trf.xlu0
    %v170 = vpop.trf.xlu0
    %v171 = vpop.trf.xlu0
    %v172 = vpop.trf.xlu0
    %v173 = vpop.trf.xlu0
    %v174 = vpop.trf.xlu0
    %v175 = vpop.trf.xlu0
    %v176 = vpop.trf.xlu0
    %v177 = vpop.trf.xlu0
    %v178 = vpop.trf.xlu0
    %v179 = vpop.trf.xlu0
    %v180 = vpop.trf.xlu0
    %vm181 = vcmask 122880
    %182 = vst.msk [vmem:[#allocation8] sm:$0x1] %vm181, %v165
    // Predicated region
    $region30: #{tpu_custom_call.1} parent=1 // pred_check
      _
    $region31: #{tpu_custom_call.1} parent=1 // pred_check_branch
      %184 = sbr.rel (0) target = $region33
    $region32: #{tpu_custom_call.1} parent=1 // pred_region
      %s186 = ssub.s32 16, 16
      %187 = vsyncadd [#allocation5], %s186
      %s189 = sshll.u32 [#allocation8], 4
      %s190 = int_to_ptr.vmem [resolvable:$true] %s189
      %192 = dma.vmem_to_hbm [thread:$0]  %s190, 16, %s5, [#allocation5]
    $region33: #{tpu_custom_call.1} parent=1 // pred_fallthru
      _
    // Predicated region
    $region34: #{tpu_custom_call.1} parent=1 // pred_check
      _
    $region35: #{tpu_custom_call.1} parent=1 // pred_check_branch
      %194 = sbr.rel (0) target = $region37
    $region36: #{tpu_custom_call.1} parent=1 // pred_region
      %195 = dma.done [#allocation5], 16
    $region37: #{tpu_custom_call.1} parent=1 // pred_fallthru
      _
    %196 = vsyncpa [#allocation4], 1
    %197 = vsyncpa [#allocation7], 1
    %198 = vsyncpa [#allocation5], 1

</llo_original>
